<compile_context>
chip_gen: v6e
topology: v6e:2x2x1
jax: 0.10.0
libtpu: 0.0.40
codegen_flags: <defaults>
</compile_context>

<pallas_src>
import jax
import jax.numpy as jnp
from jax.experimental import pallas as pl
from jax.experimental.pallas import tpu as pltpu


def _ceil_to(v, m):
    return ((v + m - 1) // m) * m


def _divisor_tile(total, want, mult):
    """Largest multiple of `mult` that divides `total` and is <= max(want, mult)."""
    want = max(want, mult)
    best = mult
    t = mult
    while t <= min(want, total):
        if total % t == 0:
            best = t
        t += mult
    return best


def _vmem_capacity_bytes():
    """Per-core VMEM capacity; conservative (v7x: 64 MiB/TC) fallback if query fails."""
    try:
        cap = getattr(pltpu.get_tpu_info(), "vmem_capacity_bytes", None)
        if cap:
            return int(cap)
    except Exception:
        pass
    return 64 * 1024 * 1024


def _swiglu_kernel(x_ref, w1_ref, w2_ref, b1_ref, b2_ref, o_ref, acc1_ref, acc2_ref):
    # x_ref:          (tm, tk)   activation tile (MXU dtype)
    # w1_ref, w2_ref: (tk, tn)   weight tiles (MXU dtype, pre-packed [K, N] layout)
    # b1_ref, b2_ref: (1, tn)    f32 biases
    # o_ref:          (tm, tn)   output tile (resident across the K axis)
    # acc*_ref:       (tm, tn)   f32 accumulators
    k = pl.program_id(2)

    @pl.when(k == 0)
    def _init():
        # Seed accumulators with the bias -> no extra (tm, tn) add in finalize.
        acc1_ref[...] = jnp.broadcast_to(b1_ref[...], acc1_ref.shape)
        acc2_ref[...] = jnp.broadcast_to(b2_ref[...], acc2_ref.shape)

    x = x_ref[...]
    acc1_ref[...] += jnp.dot(x, w1_ref[...], preferred_element_type=jnp.float32)
    acc2_ref[...] += jnp.dot(x, w2_ref[...], preferred_element_type=jnp.float32)

    @pl.when(k == pl.num_programs(2) - 1)
    def _finalize():
        h1 = acc1_ref[...]
        h2 = acc2_ref[...]
        # SiLU(h1) * h2; sigmoid via EUP exp + approximate reciprocal (no VPU divide).
        sig = pl.reciprocal(1.0 + jnp.exp(-h1), approx=True)
        o_ref[...] = (h1 * sig * h2).astype(o_ref.dtype)


def pack_swiglu_params(w1, b1, w2, b2, *, mxu_dtype=jnp.bfloat16):
    """One-time weight repack: do this at weight-load time, NOT per forward call.

    w1, w2: [N, K] (PyTorch nn.Linear layout), b1, b2: [N].
    Returns [K_pad, N_pad] MXU-dtype weights and [1, N_pad] f32 biases.
    """
    n, k = w1.shape
    k_pad = _ceil_to(k, 128)
    n_pad = _ceil_to(n, 128)

    def pack_w(w):
        return jnp.pad(w.T.astype(mxu_dtype), ((0, k_pad - k), (0, n_pad - n)))

    def pack_b(b):
        return jnp.pad(b.astype(jnp.float32), (0, n_pad - n)).reshape(1, n_pad)

    return dict(w1=pack_w(w1), w2=pack_w(w2), b1=pack_b(b1), b2=pack_b(b2),
                n=n, k=k, mxu_dtype=jnp.dtype(mxu_dtype))


def swiglu_pallas_packed(x, params, *, tm=1024, tn=256, tk=2048, out_dtype=None):
    """SwiGLU forward on pre-packed params: SiLU(x @ W1^T + b1) * (x @ W2^T + b2)."""
    mxu_dtype = params["mxu_dtype"]
    K, N = params["k"], params["n"]
    if x.shape[-1] != K:
        raise ValueError(f"x last dim {x.shape[-1]} != packed K {K}")
    out_dtype = out_dtype or x.dtype

    K_pad, N_pad = params["w1"].shape
    orig_shape = x.shape
    x2d = x.reshape(-1, K)
    M = x2d.shape[0]

    in_b = jnp.dtype(mxu_dtype).itemsize
    out_b = jnp.dtype(out_dtype).itemsize
    sub = max(8, 32 // in_b)  # sublane granularity: f32=8, bf16=16, fp8/int8=32

    # ---- tile selection (lane-dense, clamped to the padded problem) ----
    tm = _ceil_to(max(sub, min(tm, _ceil_to(M, sub))), sub)
    tn = _divisor_tile(N_pad, tn, 128)
    tk = K_pad if K_pad <= 2048 else _divisor_tile(K_pad, tk, 128)

    # ---- generation-aware VMEM budget (v7x: 64 MiB/TC; v5e/v6e: 128 MiB) ----
    cap = _vmem_capacity_bytes()
    budget = int(0.80 * cap)

    def est_vmem(tm_, tn_, tk_):
        return (2 * tm_ * tk_ * in_b          # x tile (double-buffered)
                + 2 * 2 * tk_ * tn_ * in_b    # W1 + W2 streams (double-buffered)
                + 2 * 2 * tn_ * 4             # biases
                + 2 * tm_ * tn_ * out_b       # output tile
                + 2 * tm_ * tn_ * 4)          # two f32 accumulators

    while est_vmem(tm, tn, tk) > budget:
        if tk > 128:
            tk = _divisor_tile(K_pad, tk // 2, 128)     # trim K tile first
        elif tm > sub:
            tm = max(sub, _ceil_to(tm // 2, sub))
        elif tn > 128:
            tn = _divisor_tile(N_pad, tn // 2, 128)
        else:
            break

    M_pad = _ceil_to(M, tm)

    # Keep the parallel (M, N) grid splittable so both v7x TensorCores get work.
    if (M_pad // tm) * (N_pad // tn) == 1:
        new_tn = _divisor_tile(N_pad, tn // 2, 128)
        if new_tn < tn:
            tn = new_tn
        elif tm >= 2 * sub:
            tm = _ceil_to(tm // 2, sub)
            M_pad = _ceil_to(M, tm)

    grid = (M_pad // tm, N_pad // tn, K_pad // tk)

    # ---- hot path: pad + cast activations only (weights were packed once) ----
    xp = jnp.pad(x2d.astype(mxu_dtype), ((0, M_pad - M), (0, K_pad - K)))

    # Decode / small-M regime is pure weight streaming: deepen the weight pipeline.
    w_pipe = {}
    if grid[0] == 1 and grid[1] * grid[2] >= 3:
        w_pipe = dict(pipeline_mode=pl.Buffered(3))
    w1_spec = pl.BlockSpec((tk, tn), lambda i, j, k: (k, j), **w_pipe)
    w2_spec = pl.BlockSpec((tk, tn), lambda i, j, k: (k, j), **w_pipe)

    vmem_limit = int(min(max(2 * est_vmem(tm, tn, tk), 32 * 1024 * 1024),
                         int(0.85 * cap)))

    out = pl.pallas_call(
        _swiglu_kernel,
        out_shape=jax.ShapeDtypeStruct((M_pad, N_pad), out_dtype),
        grid_spec=pltpu.PrefetchScalarGridSpec(
            num_scalar_prefetch=0,
            grid=grid,
            in_specs=[
                pl.BlockSpec((tm, tk), lambda i, j, k: (i, k)),   # x row/K tile
                w1_spec,                                          # W1 tile
                w2_spec,                                          # W2 tile
                pl.BlockSpec((1, tn), lambda i, j, k: (0, j)),    # b1
                pl.BlockSpec((1, tn), lambda i, j, k: (0, j)),    # b2
            ],
            out_specs=pl.BlockSpec((tm, tn), lambda i, j, k: (i, j)),
            scratch_shapes=[pltpu.VMEM((tm, tn), jnp.float32),
                            pltpu.VMEM((tm, tn), jnp.float32)],
        ),
        compiler_params=pltpu.CompilerParams(
            dimension_semantics=("parallel", "parallel", "arbitrary"),
            vmem_limit_bytes=vmem_limit,
        ),
    )(xp, params["w1"], params["w2"], params["b1"], params["b2"])

    return out[:M, :N].reshape(*orig_shape[:-1], N)


def swiglu_pallas(x, w1, b1, w2, b2, *, mxu_dtype=jnp.bfloat16, **kwargs):
    """Convenience one-shot wrapper.  Packs weights on every call — in real use,
    call pack_swiglu_params() once at weight-load time and reuse the result."""
    params = pack_swiglu_params(w1, b1, w2, b2, mxu_dtype=mxu_dtype)
    return swiglu_pallas_packed(x, params, **kwargs)


if __name__ == "__main__":
    # Small deterministic setup consistent with SwiGLU(input_dim, output_dim).
    batch, seq, input_dim, output_dim = 2, 8, 32, 32

    key = jax.random.PRNGKey(0)
    kx, kw1, kb1, kw2, kb2 = jax.random.split(key, 5)

    x = jax.random.normal(kx, (batch, seq, input_dim), dtype=jnp.float32)

    # PyTorch nn.Linear stores weight as [out, in]; deterministic uniform init.
    bound = 1.0 / (input_dim ** 0.5)
    w1 = jax.random.uniform(kw1, (output_dim, input_dim), minval=-bound, maxval=bound,
                            dtype=jnp.float32)
    b1 = jax.random.uniform(kb1, (output_dim,), minval=-bound, maxval=bound,
                            dtype=jnp.float32)
    w2 = jax.random.uniform(kw2, (output_dim, input_dim), minval=-bound, maxval=bound,
                            dtype=jnp.float32)
    b2 = jax.random.uniform(kb2, (output_dim,), minval=-bound, maxval=bound,
                            dtype=jnp.float32)

    # Pack ONCE (weight-load time); reuse across forward calls.
    params = pack_swiglu_params(w1, b1, w2, b2)

    out = jax.block_until_ready(swiglu_pallas_packed(x, params))
    assert out.shape == (batch, seq, output_dim)

    # Reference 1: same bf16 matmul inputs, f32 accumulation (matches kernel math).
    xb = x.astype(jnp.bfloat16).astype(jnp.float32)
    w1b = w1.astype(jnp.bfloat16).astype(jnp.float32)
    w2b = w2.astype(jnp.bfloat16).astype(jnp.float32)
    h1 = xb @ w1b.T + b1
    h2 = xb @ w2b.T + b2
    ref_bf16 = jax.nn.silu(h1) * h2
    assert jnp.allclose(out, ref_bf16, atol=1e-2, rtol=1e-2)

    # Reference 2: full-f32 module semantics (looser tolerance for the bf16 MXU path).
    h1f = x @ w1.T + b1
    h2f = x @ w2.T + b2
    ref_f32 = jax.nn.silu(h1f) * h2f
    assert jnp.allclose(out, ref_f32, atol=5e-2, rtol=5e-2)

    # Ragged-M call reusing the same packed params (exercises the padding path).
    x_r = jax.random.normal(kx, (3, 5, input_dim), dtype=jnp.float32)
    out_r = jax.block_until_ready(swiglu_pallas_packed(x_r, params))
    xrb = x_r.astype(jnp.bfloat16).astype(jnp.float32)
    ref_r = jax.nn.silu(xrb @ w1b.T + b1) * (xrb @ w2b.T + b2)
    assert out_r.shape == (3, 5, output_dim)
    assert jnp.allclose(out_r, ref_r, atol=1e-2, rtol=1e-2)

    print("KERNEL_OK")
</pallas_src>

<mosaic_0001>
module attributes {stable_mosaic.version = 11 : i64} {
  func.func @_swiglu_kernel(%arg0: i32, %arg1: i32, %arg2: i32, %arg3: memref<16x128xbf16, #tpu.memory_space<vmem>>, %arg4: memref<128x128xbf16, #tpu.memory_space<vmem>>, %arg5: memref<128x128xbf16, #tpu.memory_space<vmem>>, %arg6: memref<1x128xf32, #tpu.memory_space<vmem>>, %arg7: memref<1x128xf32, #tpu.memory_space<vmem>>, %arg8: memref<16x128xf32, #tpu.memory_space<vmem>>, %arg9: memref<16x128xf32, #tpu.memory_space<vmem>>, %arg10: memref<16x128xf32, #tpu.memory_space<vmem>>) attributes {dimension_semantics = [#tpu.dimension_semantics<parallel>, #tpu.dimension_semantics<parallel>, #tpu.dimension_semantics<arbitrary>], iteration_bounds = array<i64: 1, 1, 1>, scalar_prefetch = 0 : i64, scratch_operands = 2 : i64, tpu.core_type = #tpu.core_type<tc>, window_params = [{transform_indices = @transform_0, window_bounds = array<i64: 16, 128>}, {transform_indices = @transform_1, window_bounds = array<i64: 128, 128>}, {transform_indices = @transform_2, window_bounds = array<i64: 128, 128>}, {transform_indices = @transform_3, window_bounds = array<i64: 1, 128>}, {transform_indices = @transform_4, window_bounds = array<i64: 1, 128>}, {transform_indices = @transform_5, window_bounds = array<i64: 16, 128>}]} {
    %c0_i32 = arith.constant 0 : i32
    %0 = arith.cmpi eq, %arg2, %c0_i32 : i32
    %1 = arith.extui %0 : i1 to i32
    %c0_i32_0 = arith.constant 0 : i32
    %2 = arith.cmpi ne, %1, %c0_i32_0 : i32
    scf.if %2 {
      %c0_17 = arith.constant 0 : index
      %c0_18 = arith.constant 0 : index
      %17 = vector.load %arg6[%c0_17, %c0_18] : memref<1x128xf32, #tpu.memory_space<vmem>>, vector<1x128xf32>
      %18 = vector.shape_cast %17 : vector<1x128xf32> to vector<1x128xf32>
      %19 = vector.broadcast %18 : vector<1x128xf32> to vector<16x128xf32>
      %c0_19 = arith.constant 0 : index
      %c0_20 = arith.constant 0 : index
      %20 = vector.load %arg9[%c0_19, %c0_20] : memref<16x128xf32, #tpu.memory_space<vmem>>, vector<16x128xf32>
      tpu.vector_store %arg9[%c0_19, %c0_20], %19 {strides = array<i32>} : memref<16x128xf32, #tpu.memory_space<vmem>>, vector<16x128xf32>,
      %c0_21 = arith.constant 0 : index
      %c0_22 = arith.constant 0 : index
      %21 = vector.load %arg7[%c0_21, %c0_22] : memref<1x128xf32, #tpu.memory_space<vmem>>, vector<1x128xf32>
      %22 = vector.shape_cast %21 : vector<1x128xf32> to vector<1x128xf32>
      %23 = vector.broadcast %22 : vector<1x128xf32> to vector<16x128xf32>
      %c0_23 = arith.constant 0 : index
      %c0_24 = arith.constant 0 : index
      %24 = vector.load %arg10[%c0_23, %c0_24] : memref<16x128xf32, #tpu.memory_space<vmem>>, vector<16x128xf32>
      tpu.vector_store %arg10[%c0_23, %c0_24], %23 {strides = array<i32>} : memref<16x128xf32, #tpu.memory_space<vmem>>, vector<16x128xf32>,
    } else {
    }
    %c0 = arith.constant 0 : index
    %c0_1 = arith.constant 0 : index
    %3 = vector.load %arg3[%c0, %c0_1] : memref<16x128xbf16, #tpu.memory_space<vmem>>, vector<16x128xbf16>
    %c0_2 = arith.constant 0 : index
    %c0_3 = arith.constant 0 : index
    %4 = vector.load %arg9[%c0_2, %c0_3] : memref<16x128xf32, #tpu.memory_space<vmem>>, vector<16x128xf32>
    %c0_4 = arith.constant 0 : index
    %c0_5 = arith.constant 0 : index
    %5 = vector.load %arg4[%c0_4, %c0_5] : memref<128x128xbf16, #tpu.memory_space<vmem>>, vector<128x128xbf16>
    %cst = arith.constant dense<0.000000e+00> : vector<16x128xf32>
    %6 = tpu.matmul %3, %5, %cst {dimension_numbers = #tpu.dot_dimension_numbers<[1], [0], [0], [1], [0, 0, 1, 1], [], []>} : vector<16x128xbf16>, vector<128x128xbf16>, vector<16x128xf32> -> vector<16x128xf32>
    %7 = arith.addf %4, %6 : vector<16x128xf32>
    %c0_6 = arith.constant 0 : index
    %c0_7 = arith.constant 0 : index
    %8 = vector.load %arg9[%c0_6, %c0_7] : memref<16x128xf32, #tpu.memory_space<vmem>>, vector<16x128xf32>
    tpu.vector_store %arg9[%c0_6, %c0_7], %7 {strides = array<i32>} : memref<16x128xf32, #tpu.memory_space<vmem>>, vector<16x128xf32>,
    %c0_8 = arith.constant 0 : index
    %c0_9 = arith.constant 0 : index
    %9 = vector.load %arg10[%c0_8, %c0_9] : memref<16x128xf32, #tpu.memory_space<vmem>>, vector<16x128xf32>
    %c0_10 = arith.constant 0 : index
    %c0_11 = arith.constant 0 : index
    %10 = vector.load %arg5[%c0_10, %c0_11] : memref<128x128xbf16, #tpu.memory_space<vmem>>, vector<128x128xbf16>
    %cst_12 = arith.constant dense<0.000000e+00> : vector<16x128xf32>
    %11 = tpu.matmul %3, %10, %cst_12 {dimension_numbers = #tpu.dot_dimension_numbers<[1], [0], [0], [1], [0, 0, 1, 1], [], []>} : vector<16x128xbf16>, vector<128x128xbf16>, vector<16x128xf32> -> vector<16x128xf32>
    %12 = arith.addf %9, %11 : vector<16x128xf32>
    %c0_13 = arith.constant 0 : index
    %c0_14 = arith.constant 0 : index
    %13 = vector.load %arg10[%c0_13, %c0_14] : memref<16x128xf32, #tpu.memory_space<vmem>>, vector<16x128xf32>
    tpu.vector_store %arg10[%c0_13, %c0_14], %12 {strides = array<i32>} : memref<16x128xf32, #tpu.memory_space<vmem>>, vector<16x128xf32>,
    %c0_i32_15 = arith.constant 0 : i32
    %14 = arith.cmpi eq, %arg2, %c0_i32_15 : i32
    %15 = arith.extui %14 : i1 to i32
    %c0_i32_16 = arith.constant 0 : i32
    %16 = arith.cmpi ne, %15, %c0_i32_16 : i32
    scf.if %16 {
      %c0_17 = arith.constant 0 : index
      %c0_18 = arith.constant 0 : index
      %17 = vector.load %arg9[%c0_17, %c0_18] : memref<16x128xf32, #tpu.memory_space<vmem>>, vector<16x128xf32>
      %c0_19 = arith.constant 0 : index
      %c0_20 = arith.constant 0 : index
      %18 = vector.load %arg10[%c0_19, %c0_20] : memref<16x128xf32, #tpu.memory_space<vmem>>, vector<16x128xf32>
      %cst_21 = arith.constant 0.000000e+00 : f32
      %19 = vector.broadcast %cst_21 : f32 to vector<16x128xf32>
      %20 = arith.subf %19, %17 : vector<16x128xf32>
      %21 = math.exp %20 : vector<16x128xf32>
      %cst_22 = arith.constant 1.000000e+00 : f32
      %22 = vector.broadcast %cst_22 : f32 to vector<16x128xf32>
      %23 = arith.addf %22, %21 : vector<16x128xf32>
      %24 = tpu.reciprocal %23 {approx = true} : vector<16x128xf32> -> vector<16x128xf32>
      %25 = arith.mulf %17, %24 : vector<16x128xf32>
      %26 = arith.mulf %25, %18 : vector<16x128xf32>
      %c0_23 = arith.constant 0 : index
      %c0_24 = arith.constant 0 : index
      %27 = vector.load %arg8[%c0_23, %c0_24] : memref<16x128xf32, #tpu.memory_space<vmem>>, vector<16x128xf32>
      tpu.vector_store %arg8[%c0_23, %c0_24], %26 {strides = array<i32>} : memref<16x128xf32, #tpu.memory_space<vmem>>, vector<16x128xf32>,
    } else {
    }
    return
  }
  func.func @transform_0(%arg0: i32, %arg1: i32, %arg2: i32) -> (i32, i32) {
    %c0_i32 = arith.constant 0 : i32
    return %arg0, %arg2 : i32, i32
  }
  func.func @transform_1(%arg0: i32, %arg1: i32, %arg2: i32) -> (i32, i32) {
    %c0_i32 = arith.constant 0 : i32
    return %arg2, %arg1 : i32, i32
  }
  func.func @transform_2(%arg0: i32, %arg1: i32, %arg2: i32) -> (i32, i32) {
    %c0_i32 = arith.constant 0 : i32
    return %arg2, %arg1 : i32, i32
  }
  func.func @transform_3(%arg0: i32, %arg1: i32, %arg2: i32) -> (i32, i32) {
    %c0_i32 = arith.constant 0 : i32
    %c0_i32_0 = arith.constant 0 : i32
    return %c0_i32, %arg1 : i32, i32
  }
  func.func @transform_4(%arg0: i32, %arg1: i32, %arg2: i32) -> (i32, i32) {
    %c0_i32 = arith.constant 0 : i32
    %c0_i32_0 = arith.constant 0 : i32
    return %c0_i32, %arg1 : i32, i32
  }
  func.func @transform_5(%arg0: i32, %arg1: i32, %arg2: i32) -> (i32, i32) {
    %c0_i32 = arith.constant 0 : i32
    return %arg0, %arg1 : i32, i32
  }
}

</mosaic_0001>

<llo_original>
// kernel: tpu_custom_call.1
$region0: #{tpu_custom_call.1}
  #allocation0 [shape = 'u32[]', space=smem, size = 0x4, offset = 0x4, fixed_abs, tag = 'smem constant byte address 0x4 - core index']
  #allocation1 [shape = 'u32[144,128]{1,0:T(1,128)}', space=vmem, size = 0x12000, scoped, tag = 'internal scratch']
  #allocation2 [shape = 'f32[16,128]{1,0:T(8,128)}', space=vmem, size = 0x2000, scoped, tag = 'scratch operand']
  #allocation3 [shape = 'f32[16,128]{1,0:T(8,128)}', space=vmem, size = 0x2000, scoped, tag = 'scratch operand']
  %s0 = inlined_call_operand.hbm [shape: bf16[16,128], index: 0, kind: input, shape index: {}]
  %s1 = inlined_call_operand.hbm [shape: bf16[128,128], index: 1, kind: input, shape index: {}]
  %s2 = inlined_call_operand.hbm [shape: bf16[128,128], index: 2, kind: input, shape index: {}]
  %s3 = inlined_call_operand.vmem [shape: f32[1,128], index: 3, kind: input, shape index: {}]
  %s4 = inlined_call_operand.vmem [shape: f32[1,128], index: 4, kind: input, shape index: {}]
  %s5 = inlined_call_operand.hbm [shape: f32[16,128], index: 5, kind: output, shape index: {}]
  %s6 = sld [smem:[#allocation0]]
  $region50: #{tpu_custom_call.1} parent=0
    _
  %s8 = ssub.s32 1, %s6
  %s9 = scalar_select 0, %s8, %s6
  $region1: #{tpu_custom_call.1} parent=0
    #allocation4 [shape = 'u8[4096]{0}', space=vmem, size = 0x1000, scoped, tag = 'input window, operand 0, single buffered']
    #allocation5 [shape = 's32[1]{0}', space=sflag, size = 0x4, scoped, tag = 'scoped memory for tpu_custom_call.1']
    #allocation6 [shape = 's32[1]{0}', space=sflag, size = 0x4, scoped, tag = 'scoped memory for tpu_custom_call.1']
    #allocation7 [shape = 'u8[32768]{0}', space=vmem, size = 0x8000, scoped, tag = 'input window, operand 1, single buffered']
    #allocation8 [shape = 's32[1]{0}', space=sflag, size = 0x4, scoped, tag = 'scoped memory for tpu_custom_call.1']
    #allocation9 [shape = 'u8[32768]{0}', space=vmem, size = 0x8000, scoped, tag = 'input window, operand 2, single buffered']
    #allocation10 [shape = 'u8[8192]{0}', space=vmem, size = 0x2000, scoped, tag = 'output window, operand 0, single buffered']
    %10 = vsyncpa [#allocation5], 0
    %11 = vsyncpa [#allocation8], 0
    %12 = vsyncpa [#allocation6], 0
    // Predicated region
    $region2: #{tpu_custom_call.1} parent=1 // pred_check
      _
    $region3: #{tpu_custom_call.1} parent=1 // pred_check_branch
      %14 = sbr.rel (0) target = $region5
    $region4: #{tpu_custom_call.1} parent=1 // pred_region
      %s16 = ssub.s32 128, 128
      %17 = vsyncadd [#allocation5], %s16
      %s18 = sshll.u32 [#allocation4], 4
      %s19 = int_to_ptr.vmem [resolvable:$true] %s18
      %24 = dma.hbm_to_vmem [thread:$0]  %s0, 128, %s19, [#allocation5], 64, 64, 4
    $region5: #{tpu_custom_call.1} parent=1 // pred_fallthru
      _
    // Predicated region
    $region6: #{tpu_custom_call.1} parent=1 // pred_check
      _
    $region7: #{tpu_custom_call.1} parent=1 // pred_check_branch
      %26 = sbr.rel (0) target = $region9
    $region8: #{tpu_custom_call.1} parent=1 // pred_region
      %s28 = ssub.s32 1024, 1024
      %29 = vsyncadd [#allocation8], %s28
      %s30 = sshll.u32 [#allocation7], 4
      %s31 = int_to_ptr.vmem [resolvable:$true] %s30
      %36 = dma.hbm_to_vmem [thread:$0]  %s1, 1024, %s31, [#allocation8], 64, 64, 4
    $region9: #{tpu_custom_call.1} parent=1 // pred_fallthru
      _
    // Predicated region
    $region10: #{tpu_custom_call.1} parent=1 // pred_check
      _
    $region11: #{tpu_custom_call.1} parent=1 // pred_check_branch
      %38 = sbr.rel (0) target = $region13
    $region12: #{tpu_custom_call.1} parent=1 // pred_region
      %s40 = ssub.s32 1024, 1024
      %41 = vsyncadd [#allocation8], %s40
      %s42 = sshll.u32 [#allocation9], 4
      %s43 = int_to_ptr.vmem [resolvable:$true] %s42
      %48 = dma.hbm_to_vmem [thread:$0]  %s2, 1024, %s43, [#allocation8], 64, 64, 4
    $region13: #{tpu_custom_call.1} parent=1 // pred_fallthru
      _
    // Predicated region
    $region14: #{tpu_custom_call.1} parent=1 // pred_check
      _
    $region15: #{tpu_custom_call.1} parent=1 // pred_check_branch
      %50 = sbr.rel (0) target = $region17
    $region16: #{tpu_custom_call.1} parent=1 // pred_region
      _
    $region17: #{tpu_custom_call.1} parent=1 // pred_fallthru
      _
    // Predicated region
    $region18: #{tpu_custom_call.1} parent=1 // pred_check
      _
    $region19: #{tpu_custom_call.1} parent=1 // pred_check_branch
      %52 = sbr.rel (0) target = $region21
    $region20: #{tpu_custom_call.1} parent=1 // pred_region
      _
    $region21: #{tpu_custom_call.1} parent=1 // pred_fallthru
      _
    // Predicated region
    $region22: #{tpu_custom_call.1} parent=1 // pred_check
      _
    $region23: #{tpu_custom_call.1} parent=1 // pred_check_branch
      %54 = sbr.rel (0) target = $region25
    $region24: #{tpu_custom_call.1} parent=1 // pred_region
      %55 = dma.done [#allocation5], 128
    $region25: #{tpu_custom_call.1} parent=1 // pred_fallthru
      _
    // Predicated region
    $region26: #{tpu_custom_call.1} parent=1 // pred_check
      _
    $region27: #{tpu_custom_call.1} parent=1 // pred_check_branch
      %57 = sbr.rel (0) target = $region29
    $region28: #{tpu_custom_call.1} parent=1 // pred_region
      %58 = dma.done [#allocation8], 1024
    $region29: #{tpu_custom_call.1} parent=1 // pred_fallthru
      _
    // Predicated region
    $region30: #{tpu_custom_call.1} parent=1 // pred_check
      _
    $region31: #{tpu_custom_call.1} parent=1 // pred_check_branch
      %60 = sbr.rel (0) target = $region33
    $region32: #{tpu_custom_call.1} parent=1 // pred_region
      %61 = dma.done [#allocation8], 1024
    $region33: #{tpu_custom_call.1} parent=1 // pred_fallthru
      _
    %p63 = scmp.eq.s32.totalorder 0, 0
    // Predicated region
    $region34: #{tpu_custom_call.1} parent=1 // pred_check
      %p64 = pneg %p63
    $region35: #{tpu_custom_call.1} parent=1 // pred_check_branch
      %66 = sbr.rel (%p64) target = $region37
    $region36: #{tpu_custom_call.1} parent=1 // pred_region
      %v67 = vld [vmem:[%s3] sm:$0x1]
      %v69 = vlaneseq
      %v70 = vshrl.u32 %v69, 7
      %v71 = vsub.s32 0, %v70
      %v72 = vrot.slane %v67, %v71
      %74 = vst [vmem:[#allocation2] sm:$0xff] %v72
      %75 = vst [vmem:[#allocation2 + $0x8] sm:$0xff] %v72
      %v76 = vld [vmem:[%s4] sm:$0x1]
      %v78 = vlaneseq
      %v79 = vshrl.u32 %v78, 7
      %v80 = vsub.s32 0, %v79
      %v81 = vrot.slane %v76, %v80
      %83 = vst [vmem:[#allocation3] sm:$0xff] %v81
      %84 = vst [vmem:[#allocation3 + $0x8] sm:$0xff] %v81
    $region37: #{tpu_custom_call.1} parent=1 // pred_fallthru
      _
    %v85 = vld [vmem:[#allocation4] sm:$0xf]
    %v86 = vld [vmem:[#allocation4 + $0x4] sm:$0xf]
    %v87 = vld [vmem:[#allocation2] sm:$0xff]
    %v88 = vld [vmem:[#allocation2 + $0x8] sm:$0xff]
    %v89 = vld [vmem:[#allocation7] sm:$0xf]
    %v90 = vld [vmem:[#allocation7 + $0x4] sm:$0xf]
    %v91 = vld [vmem:[#allocation7 + $0x8] sm:$0xf]
    %v92 = vld [vmem:[#allocation7 + $0xc] sm:$0xf]
    %v93 = vld [vmem:[#allocation7 + $0x10] sm:$0xf]
    %v94 = vld [vmem:[#allocation7 + $0x14] sm:$0xf]
    %v95 = vld [vmem:[#allocation7 + $0x18] sm:$0xf]
    %v96 = vld [vmem:[#allocation7 + $0x1c] sm:$0xf]
    %v97 = vld [vmem:[#allocation7 + $0x20] sm:$0xf]
    %v98 = vld [vmem:[#allocation7 + $0x24] sm:$0xf]
    %v99 = vld [vmem:[#allocation7 + $0x28] sm:$0xf]
    %v100 = vld [vmem:[#allocation7 + $0x2c] sm:$0xf]
    %v101 = vld [vmem:[#allocation7 + $0x30] sm:$0xf]
    %v102 = vld [vmem:[#allocation7 + $0x34] sm:$0xf]
    %v103 = vld [vmem:[#allocation7 + $0x38] sm:$0xf]
    %v104 = vld [vmem:[#allocation7 + $0x3c] sm:$0xf]
    %v107 = vunpack.c.l.b16 %v85
    %v108 = vunpack.c.l.b16 %v86
    %v109 = vpack.c.b16 %v108, %v107
    %v127 = vunpack.c.l.b16 %v89
    %v128 = vunpack.c.l.b16 %v90
    %v129 = vunpack.c.l.b16 %v91
    %v130 = vunpack.c.l.b16 %v92
    %v131 = vunpack.c.l.b16 %v93
    %v132 = vunpack.c.l.b16 %v94
    %v133 = vunpack.c.l.b16 %v95
    %v134 = vunpack.c.l.b16 %v96
    %v135 = vunpack.c.l.b16 %v97
    %v136 = vunpack.c.l.b16 %v98
    %v137 = vunpack.c.l.b16 %v99
    %v138 = vunpack.c.l.b16 %v100
    %v139 = vunpack.c.l.b16 %v101
    %v140 = vunpack.c.l.b16 %v102
    %v141 = vunpack.c.l.b16 %v103
    %v142 = vunpack.c.l.b16 %v104
    %v143 = vpack.c.b16 %v128, %v127
    %v144 = vpack.c.b16 %v130, %v129
    %v145 = vpack.c.b16 %v132, %v131
    %v146 = vpack.c.b16 %v134, %v133
    %v147 = vpack.c.b16 %v136, %v135
    %v148 = vpack.c.b16 %v138, %v137
    %v149 = vpack.c.b16 %v140, %v139
    %v150 = vpack.c.b16 %v142, %v141
    %159 = vmatprep.subr.bf16.mxu0 0
    %160 = vmatpush1.bf16.msra.mxu0 %v150
    %161 = vmatprep.subr.bf16.mxu0 0
    %162 = vmatpush1.bf16.msra.mxu0 %v149
    %163 = vmatprep.subr.bf16.mxu0 0
    %164 = vmatpush1.bf16.msra.mxu0 %v148
    %165 = vmatprep.subr.bf16.mxu0 0
    %166 = vmatpush1.bf16.msra.mxu0 %v147
    %167 = vmatprep.subr.bf16.mxu0 0
    %168 = vmatpush1.bf16.msra.mxu0 %v146
    %169 = vmatprep.subr.bf16.mxu0 0
    %170 = vmatpush1.bf16.msra.mxu0 %v145
    %171 = vmatprep.subr.bf16.mxu0 0
    %172 = vmatpush1.bf16.msra.mxu0 %v144
    %173 = vmatprep.subr.bf16.mxu0 0
    %174 = vmatpush1.bf16.msra.mxu0 %v143
    %175 = vmatprep.subr.bf16.mxu0 0
    %176 = vmatpush2.bf16.msra.mxu0 0
    %177 = vmatprep.subr.bf16.mxu0 0
    %178 = vmatpush2.bf16.msra.mxu0 0
    %179 = vmatprep.subr.bf16.mxu0 0
    %180 = vmatpush2.bf16.msra.mxu0 0
    %181 = vmatprep.subr.bf16.mxu0 0
    %182 = vmatpush2.bf16.msra.mxu0 0
    %183 = vmatprep.subr.bf16.mxu0 0
    %184 = vmatpush2.bf16.msra.mxu0 0
    %185 = vmatprep.subr.bf16.mxu0 0
    %186 = vmatpush2.bf16.msra.mxu0 0
    %187 = vmatprep.subr.bf16.mxu0 0
    %188 = vmatpush2.bf16.msra.mxu0 0
    %189 = vmatprep.subr.bf16.mxu0 0
    %190 = vmatpush2.bf16.msra.mxu0 0
    %191 = vmatprep.mubr.bf16.mxu0 0
    %192 = vmatmul.mubr.bf16.gmra.mxu0 %v109
    %v193 = vpop.f32.mrf.mxu0
    %v194 = vadd.f32 0.0, %v193
    %v195 = vpop.f32.mrf.mxu0
    %v196 = vpop.f32.mrf.mxu0
    %v197 = vadd.f32 0.0, %v196
    %v198 = vpop.f32.mrf.mxu0
    %199 = vdwg.mxu0
    %v200 = vadd.f32 %v87, %v194
    %v201 = vadd.f32 %v88, %v197
    %202 = vst [vmem:[#allocation2] sm:$0xff] %v200
    %203 = vst [vmem:[#allocation2 + $0x8] sm:$0xff] %v201
    %v204 = vld [vmem:[#allocation3] sm:$0xff]
    %v205 = vld [vmem:[#allocation3 + $0x8] sm:$0xff]
    %v206 = vld [vmem:[#allocation9] sm:$0xf]
    %v207 = vld [vmem:[#allocation9 + $0x4] sm:$0xf]
    %v208 = vld [vmem:[#allocation9 + $0x8] sm:$0xf]
    %v209 = vld [vmem:[#allocation9 + $0xc] sm:$0xf]
    %v210 = vld [vmem:[#allocation9 + $0x10] sm:$0xf]
    %v211 = vld [vmem:[#allocation9 + $0x14] sm:$0xf]
    %v212 = vld [vmem:[#allocation9 + $0x18] sm:$0xf]
    %v213 = vld [vmem:[#allocation9 + $0x1c] sm:$0xf]
    %v214 = vld [vmem:[#allocation9 + $0x20] sm:$0xf]
    %v215 = vld [vmem:[#allocation9 + $0x24] sm:$0xf]
    %v216 = vld [vmem:[#allocation9 + $0x28] sm:$0xf]
    %v217 = vld [vmem:[#allocation9 + $0x2c] sm:$0xf]
    %v218 = vld [vmem:[#allocation9 + $0x30] sm:$0xf]
    %v219 = vld [vmem:[#allocation9 + $0x34] sm:$0xf]
    %v220 = vld [vmem:[#allocation9 + $0x38] sm:$0xf]
    %v221 = vld [vmem:[#allocation9 + $0x3c] sm:$0xf]
    %v238 = vunpack.c.l.b16 %v206
    %v239 = vunpack.c.l.b16 %v207
    %v240 = vunpack.c.l.b16 %v208
    %v241 = vunpack.c.l.b16 %v209
    %v242 = vunpack.c.l.b16 %v210
    %v243 = vunpack.c.l.b16 %v211
    %v244 = vunpack.c.l.b16 %v212
    %v245 = vunpack.c.l.b16 %v213
    %v246 = vunpack.c.l.b16 %v214
    %v247 = vunpack.c.l.b16 %v215
    %v248 = vunpack.c.l.b16 %v216
    %v249 = vunpack.c.l.b16 %v217
    %v250 = vunpack.c.l.b16 %v218
    %v251 = vunpack.c.l.b16 %v219
    %v252 = vunpack.c.l.b16 %v220
    %v253 = vunpack.c.l.b16 %v221
    %v254 = vpack.c.b16 %v239, %v238
    %v255 = vpack.c.b16 %v241, %v240
    %v256 = vpack.c.b16 %v243, %v242
    %v257 = vpack.c.b16 %v245, %v244
    %v258 = vpack.c.b16 %v247, %v246
    %v259 = vpack.c.b16 %v249, %v248
    %v260 = vpack.c.b16 %v251, %v250
    %v261 = vpack.c.b16 %v253, %v252
    %270 = vmatprep.subr.bf16.mxu0 0
    %271 = vmatpush1.bf16.msra.mxu0 %v261
    %272 = vmatprep.subr.bf16.mxu0 0
    %273 = vmatpush1.bf16.msra.mxu0 %v260
    %274 = vmatprep.subr.bf16.mxu0 0
    %275 = vmatpush1.bf16.msra.mxu0 %v259
    %276 = vmatprep.subr.bf16.mxu0 0
    %277 = vmatpush1.bf16.msra.mxu0 %v258
    %278 = vmatprep.subr.bf16.mxu0 0
    %279 = vmatpush1.bf16.msra.mxu0 %v257
    %280 = vmatprep.subr.bf16.mxu0 0
    %281 = vmatpush1.bf16.msra.mxu0 %v256
    %282 = vmatprep.subr.bf16.mxu0 0
    %283 = vmatpush1.bf16.msra.mxu0 %v255
    %284 = vmatprep.subr.bf16.mxu0 0
    %285 = vmatpush1.bf16.msra.mxu0 %v254
    %286 = vmatprep.subr.bf16.mxu0 0
    %287 = vmatpush2.bf16.msra.mxu0 0
    %288 = vmatprep.subr.bf16.mxu0 0
    %289 = vmatpush2.bf16.msra.mxu0 0
    %290 = vmatprep.subr.bf16.mxu0 0
    %291 = vmatpush2.bf16.msra.mxu0 0
    %292 = vmatprep.subr.bf16.mxu0 0
    %293 = vmatpush2.bf16.msra.mxu0 0
    %294 = vmatprep.subr.bf16.mxu0 0
    %295 = vmatpush2.bf16.msra.mxu0 0
    %296 = vmatprep.subr.bf16.mxu0 0
    %297 = vmatpush2.bf16.msra.mxu0 0
    %298 = vmatprep.subr.bf16.mxu0 0
    %299 = vmatpush2.bf16.msra.mxu0 0
    %300 = vmatprep.subr.bf16.mxu0 0
    %301 = vmatpush2.bf16.msra.mxu0 0
    %302 = vmatprep.mubr.bf16.mxu0 0
    %303 = vmatmul.mubr.bf16.gmra.mxu0 %v109
    %v304 = vpop.f32.mrf.mxu0
    %v305 = vadd.f32 0.0, %v304
    %v306 = vpop.f32.mrf.mxu0
    %v307 = vpop.f32.mrf.mxu0
    %v308 = vadd.f32 0.0, %v307
    %v309 = vpop.f32.mrf.mxu0
    %310 = vdwg.mxu0
    %v311 = vadd.f32 %v204, %v305
    %v312 = vadd.f32 %v205, %v308
    %313 = vst [vmem:[#allocation3] sm:$0xff] %v311
    %314 = vst [vmem:[#allocation3 + $0x8] sm:$0xff] %v312
    // Predicated region
    $region38: #{tpu_custom_call.1} parent=1 // pred_check
      %p315 = pneg %p63
    $region39: #{tpu_custom_call.1} parent=1 // pred_check_branch
      %317 = sbr.rel (%p315) target = $region41
    $region40: #{tpu_custom_call.1} parent=1 // pred_region
      %v318 = vld [vmem:[#allocation2] sm:$0xff]
      %v319 = vld [vmem:[#allocation2 + $0x8] sm:$0xff]
      %v320 = vld [vmem:[#allocation3] sm:$0xff]
      %v321 = vld [vmem:[#allocation3 + $0x8] sm:$0xff]
      %v322 = vsub.f32 0.0, %v318
      %v323 = vsub.f32 0.0, %v319
      %v324 = vmul.f32 %v322, 1.442695
      %v325 = vpow.pop %v324
      %v326 = vmul.f32 %v323, 1.442695
      %v327 = vpow.pop %v326
      %v328 = vadd.f32 %v325, 1.0
      %v329 = vadd.f32 %v327, 1.0
      %v330 = vrcp.pop %v328
      %v331 = vrcp.pop %v329
      %v332 = vmul.f32 %v318, %v330
      %v333 = vmul.f32 %v319, %v331
      %v334 = vmul.f32 %v332, %v320
      %v335 = vmul.f32 %v333, %v321
      %336 = vst [vmem:[#allocation10] sm:$0xff] %v334
      %337 = vst [vmem:[#allocation10 + $0x8] sm:$0xff] %v335
    $region41: #{tpu_custom_call.1} parent=1 // pred_fallthru
      _
    // Predicated region
    $region42: #{tpu_custom_call.1} parent=1 // pred_check
      _
    $region43: #{tpu_custom_call.1} parent=1 // pred_check_branch
      %339 = sbr.rel (0) target = $region45
    $region44: #{tpu_custom_call.1} parent=1 // pred_region
      %s341 = ssub.s32 256, 256
      %342 = vsyncadd [#allocation6], %s341
      %s343 = sshll.u32 [#allocation10], 4
      %s344 = int_to_ptr.vmem [resolvable:$true] %s343
      %349 = dma.vmem_to_hbm [thread:$0]  %s344, 256, %s5, [#allocation6], 128, 128, 8
    $region45: #{tpu_custom_call.1} parent=1 // pred_fallthru
      _
    // Predicated region
    $region46: #{tpu_custom_call.1} parent=1 // pred_check
      _
    $region47: #{tpu_custom_call.1} parent=1 // pred_check_branch
      %351 = sbr.rel (0) target = $region49
    $region48: #{tpu_custom_call.1} parent=1 // pred_region
      %352 = dma.done [#allocation6], 256
    $region49: #{tpu_custom_call.1} parent=1 // pred_fallthru
      _
    %353 = vsyncpa [#allocation5], 1
    %354 = vsyncpa [#allocation8], 1
    %355 = vsyncpa [#allocation6], 1

</llo_original>
